<compile_context>
chip_gen: v6e
topology: v6e:2x2x1
jax: 0.10.0
libtpu: 0.0.40
codegen_flags: <defaults>
</compile_context>

<pallas_src>
import jax
import jax.numpy as jnp
from jax.experimental import pallas as pl
from jax.experimental.pallas import tpu as pltpu

_LANE = 128
_MIN_TILE_N = 4 * _LANE            # keep tiles lane-dense and big enough to hide per-step overhead
_MAX_BLOCK_B = 256                 # sublane-aligned batch block when B is large
_VMEM_BUDGET = 12 * 1024 * 1024    # bytes for double-buffered (in + out) x tiles; safe on v5e/v6e/v7x


def _drop_path_kernel(scale_ref, x_ref, o_ref):
  # scale_ref: (block_b, 1) f32, resident across the feature axis.
  # Broadcast multiply; promotion keeps the math in f32 for low-precision inputs.
  o_ref[...] = (x_ref[...] * scale_ref[...]).astype(o_ref.dtype)


def drop_path(x, drop_prob: float = 0.0, training: bool = False, *, seed: int = 0, key=None):
  """Pallas DropPath. x: (B, ...). Identity when drop_prob == 0 or not training."""
  if drop_prob == 0.0 or not training:
    return x
  assert 0.0 < drop_prob < 1.0, f"drop_prob must be in (0, 1), got {drop_prob}"

  keep_prob = 1.0 - drop_prob
  B = x.shape[0]
  N = 1
  for d in x.shape[1:]:
    N *= d
  x_flat = x.reshape(B, N)  # free for contiguous arrays; no pad, no slice.

  # Per-sample Bernoulli(keep_prob) scale, precomputed once (f32), passed as a tiny input.
  # torch: keep iff floor(keep_prob + u) == 1  <=>  u >= drop_prob
  if key is None:
    key = jax.random.PRNGKey(seed)
  u = jax.random.uniform(key, (B, 1), dtype=jnp.float32)
  scale = (u >= jnp.float32(drop_prob)).astype(jnp.float32) * jnp.float32(1.0 / keep_prob)

  # ---- tiling: batch block independent of B, lane-dense feature tile under a VMEM budget ----
  block_b = B if B <= _MAX_BLOCK_B else _MAX_BLOCK_B          # full dim or multiple of 8
  bytes_per = jnp.dtype(x.dtype).itemsize
  budget_tile_n = _VMEM_BUDGET // (4 * block_b * bytes_per)   # 2 (dbl-buf) x 2 (in+out)
  budget_tile_n = max(_MIN_TILE_N, (budget_tile_n // _LANE) * _LANE)
  if N <= budget_tile_n:
    tile_n = N                                                # full feature dim in one block
  else:
    tile_n = budget_tile_n                                    # multiple of 128; ragged last block OK
  grid = (pl.cdiv(B, block_b), pl.cdiv(N, tile_n))

  out_flat = pl.pallas_call(
      _drop_path_kernel,
      out_shape=jax.ShapeDtypeStruct((B, N), x.dtype),
      grid=grid,
      in_specs=[
          pl.BlockSpec((block_b, 1), lambda bi, ni: (bi, 0)),       # scale: resident across feature axis
          pl.BlockSpec((block_b, tile_n), lambda bi, ni: (bi, ni)),  # x tile
      ],
      out_specs=pl.BlockSpec((block_b, tile_n), lambda bi, ni: (bi, ni)),
      compiler_params=pltpu.CompilerParams(
          dimension_semantics=("parallel", "parallel"),
          vmem_limit_bytes=32 * 1024 * 1024,
      ),
  )(scale, x_flat)

  return out_flat.reshape(x.shape)


class DropPath:
  """Mirror of the PyTorch module: holds drop_prob and a training flag."""

  def __init__(self, drop_prob=None):
    self.drop_prob = drop_prob
    self.training = False

  def __call__(self, x, *, seed: int = 0, key=None):
    p = 0.0 if self.drop_prob is None else self.drop_prob
    return drop_path(x, p, self.training, seed=seed, key=key)


if __name__ == "__main__":
  root = jax.random.PRNGKey(0)
  k1, k2 = jax.random.split(root)

  B, C, H, W = 2, 4, 16, 16
  x = jax.random.normal(k1, (B, C, H, W), dtype=jnp.float32)

  drop_prob = 0.25
  keep_prob = 1.0 - drop_prob

  # --- eval mode: exact identity (PyTorch returns x unchanged) ---
  m = DropPath(drop_prob)
  m.training = False
  out_eval = jax.block_until_ready(m(x))
  assert jnp.array_equal(out_eval, x), "eval mode must be identity"

  # --- drop_prob == 0 in training mode: also identity ---
  m0 = DropPath(0.0)
  m0.training = True
  assert jnp.array_equal(jax.block_until_ready(m0(x)), x), "drop_prob=0 must be identity"

  # --- training mode: per-sample stochastic depth through the Pallas kernel ---
  m.training = True
  out = jax.block_until_ready(m(x, seed=1234))
  assert out.shape == x.shape and out.dtype == x.dtype

  scaled = x / keep_prob
  for b in range(B):
    dropped = bool(jnp.all(out[b] == 0.0))
    kept = bool(jnp.allclose(out[b], scaled[b], atol=1e-5, rtol=1e-5))
    assert dropped or kept, f"sample {b}: neither dropped nor scaled by 1/keep_prob"

  # --- larger batch: same structural check + loose keep-rate sanity check ---
  B2 = 64
  x2 = jax.random.normal(k2, (B2, C, H, W), dtype=jnp.float32)
  out2 = jax.block_until_ready(drop_path(x2, drop_prob, training=True, seed=7))
  scaled2 = x2 / keep_prob
  kept_count = 0
  for b in range(B2):
    dropped = bool(jnp.all(out2[b] == 0.0))
    kept = bool(jnp.allclose(out2[b], scaled2[b], atol=1e-5, rtol=1e-5))
    assert dropped or kept, f"sample {b}: neither dropped nor scaled by 1/keep_prob"
    kept_count += int(kept)
  keep_rate = kept_count / B2
  assert keep_rate > 0.25, f"implausible keep rate {keep_rate} for keep_prob={keep_prob}"

  # --- bf16 input: scale stays f32 inside kernel, only the product is cast back ---
  xb = x.astype(jnp.bfloat16)
  outb = jax.block_until_ready(drop_path(xb, drop_prob, training=True, seed=1234))
  assert outb.dtype == jnp.bfloat16 and outb.shape == xb.shape

  print("KERNEL_OK")
</pallas_src>

<mosaic_0001>
module attributes {stable_mosaic.version = 11 : i64} {
  func.func @_drop_path_kernel(%arg0: i32, %arg1: i32, %arg2: memref<2x1xf32, #tpu.memory_space<vmem>>, %arg3: memref<2x1024xf32, #tpu.memory_space<vmem>>, %arg4: memref<2x1024xf32, #tpu.memory_space<vmem>>) attributes {dimension_semantics = [#tpu.dimension_semantics<parallel>, #tpu.dimension_semantics<parallel>], iteration_bounds = array<i64: 1, 1>, scalar_prefetch = 0 : i64, scratch_operands = 0 : i64, tpu.core_type = #tpu.core_type<tc>, window_params = [{transform_indices = @transform_0, window_bounds = array<i64: 2, 1>}, {transform_indices = @transform_1, window_bounds = array<i64: 2, 1024>}, {transform_indices = @transform_2, window_bounds = array<i64: 2, 1024>}]} {
    %c0 = arith.constant 0 : index
    %c0_0 = arith.constant 0 : index
    %0 = vector.load %arg3[%c0, %c0_0] : memref<2x1024xf32, #tpu.memory_space<vmem>>, vector<2x1024xf32>
    %c0_1 = arith.constant 0 : index
    %c0_2 = arith.constant 0 : index
    %1 = vector.load %arg2[%c0_1, %c0_2] : memref<2x1xf32, #tpu.memory_space<vmem>>, vector<2x1xf32>
    %2 = vector.broadcast %1 : vector<2x1xf32> to vector<2x1024xf32>
    %3 = arith.mulf %0, %2 : vector<2x1024xf32>
    %c0_3 = arith.constant 0 : index
    %c0_4 = arith.constant 0 : index
    %4 = vector.load %arg4[%c0_3, %c0_4] : memref<2x1024xf32, #tpu.memory_space<vmem>>, vector<2x1024xf32>
    tpu.vector_store %arg4[%c0_3, %c0_4], %3 {strides = array<i32>} : memref<2x1024xf32, #tpu.memory_space<vmem>>, vector<2x1024xf32>,
    return
  }
  func.func @transform_0(%arg0: i32, %arg1: i32) -> (i32, i32) {
    %c0_i32 = arith.constant 0 : i32
    %c0_i32_0 = arith.constant 0 : i32
    return %arg0, %c0_i32 : i32, i32
  }
  func.func @transform_1(%arg0: i32, %arg1: i32) -> (i32, i32) {
    %c0_i32 = arith.constant 0 : i32
    return %arg0, %arg1 : i32, i32
  }
  func.func @transform_2(%arg0: i32, %arg1: i32) -> (i32, i32) {
    %c0_i32 = arith.constant 0 : i32
    return %arg0, %arg1 : i32, i32
  }
}

</mosaic_0001>

<llo_original>
// kernel: tpu_custom_call.1
$region0: #{tpu_custom_call.1}
  #allocation0 [shape = 'u32[]', space=smem, size = 0x4, offset = 0x4, fixed_abs, tag = 'smem constant byte address 0x4 - core index']
  #allocation1 [shape = 'u32[144,128]{1,0:T(1,128)}', space=vmem, size = 0x12000, scoped, tag = 'internal scratch']
  %s0 = inlined_call_operand.vmem [shape: f32[2,1], index: 0, kind: input, shape index: {}]
  %s1 = inlined_call_operand.hbm [shape: f32[2,1024], index: 1, kind: input, shape index: {}]
  %s2 = inlined_call_operand.hbm [shape: f32[2,1024], index: 2, kind: output, shape index: {}]
  %s3 = sld [smem:[#allocation0]]
  $region22: #{tpu_custom_call.1} parent=0
    _
  %s5 = ssub.s32 1, %s3
  %s6 = scalar_select 0, %s5, %s3
  $region1: #{tpu_custom_call.1} parent=0
    #allocation2 [shape = 'u8[8192]{0}', space=vmem, size = 0x2000, scoped, tag = 'input window, operand 1, single buffered']
    #allocation3 [shape = 's32[1]{0}', space=sflag, size = 0x4, scoped, tag = 'scoped memory for tpu_custom_call.1']
    #allocation4 [shape = 's32[1]{0}', space=sflag, size = 0x4, scoped, tag = 'scoped memory for tpu_custom_call.1']
    #allocation5 [shape = 'u8[8192]{0}', space=vmem, size = 0x2000, scoped, tag = 'output window, operand 0, single buffered']
    %7 = vsyncpa [#allocation3], 0
    %8 = vsyncpa [#allocation4], 0
    // Predicated region
    $region2: #{tpu_custom_call.1} parent=1 // pred_check
      _
    $region3: #{tpu_custom_call.1} parent=1 // pred_check_branch
      %10 = sbr.rel (0) target = $region5
    $region4: #{tpu_custom_call.1} parent=1 // pred_region
      _
    $region5: #{tpu_custom_call.1} parent=1 // pred_fallthru
      _
    // Predicated region
    $region6: #{tpu_custom_call.1} parent=1 // pred_check
      _
    $region7: #{tpu_custom_call.1} parent=1 // pred_check_branch
      %12 = sbr.rel (0) target = $region9
    $region8: #{tpu_custom_call.1} parent=1 // pred_region
      %s14 = ssub.s32 256, 256
      %15 = vsyncadd [#allocation3], %s14
      %s17 = sshll.u32 [#allocation2], 4
      %s18 = int_to_ptr.vmem [resolvable:$true] %s17
      %20 = dma.hbm_to_vmem [thread:$0]  %s1, 256, %s18, [#allocation3]
    $region9: #{tpu_custom_call.1} parent=1 // pred_fallthru
      _
    // Predicated region
    $region10: #{tpu_custom_call.1} parent=1 // pred_check
      _
    $region11: #{tpu_custom_call.1} parent=1 // pred_check_branch
      %22 = sbr.rel (0) target = $region13
    $region12: #{tpu_custom_call.1} parent=1 // pred_region
      %23 = dma.done [#allocation3], 256
    $region13: #{tpu_custom_call.1} parent=1 // pred_fallthru
      _
    %v24 = vld [vmem:[#allocation2] sm:$0xff]
    %v25 = vld [vmem:[#allocation2 + $0x8] sm:$0xff]
    %v26 = vld [vmem:[%s0] sm:$0x3]
    %28 = vset.pattern.permute.xlu0 0
    %29 = vperm.xlu0 %28, %v26
    %v30 = vpop.permute.xlu0 %29
    %v32 = vunpack.c.l.s4 269488144
    %v33 = vunpack.c.0.s8 %v32
    %v34 = vlaneseq
    %v35 = vshrl.u32 %v34, 7
    %v36 = vsub.s32 %v33, %v35
    %v37 = vrot.slane %v30, %v36
    %v39 = vmul.f32 %v24, %v37
    %v40 = vmul.f32 %v25, %v37
    %41 = vst [vmem:[#allocation5] sm:$0xff] %v39
    %42 = vst [vmem:[#allocation5 + $0x8] sm:$0xff] %v40
    // Predicated region
    $region14: #{tpu_custom_call.1} parent=1 // pred_check
      _
    $region15: #{tpu_custom_call.1} parent=1 // pred_check_branch
      %44 = sbr.rel (0) target = $region17
    $region16: #{tpu_custom_call.1} parent=1 // pred_region
      %s46 = ssub.s32 256, 256
      %47 = vsyncadd [#allocation4], %s46
      %s49 = sshll.u32 [#allocation5], 4
      %s50 = int_to_ptr.vmem [resolvable:$true] %s49
      %52 = dma.vmem_to_hbm [thread:$0]  %s50, 256, %s2, [#allocation4]
    $region17: #{tpu_custom_call.1} parent=1 // pred_fallthru
      _
    // Predicated region
    $region18: #{tpu_custom_call.1} parent=1 // pred_check
      _
    $region19: #{tpu_custom_call.1} parent=1 // pred_check_branch
      %54 = sbr.rel (0) target = $region21
    $region20: #{tpu_custom_call.1} parent=1 // pred_region
      %55 = dma.done [#allocation4], 256
    $region21: #{tpu_custom_call.1} parent=1 // pred_fallthru
      _
    %56 = vsyncpa [#allocation3], 1
    %57 = vsyncpa [#allocation4], 1

</llo_original>
